<compile_context>
chip_gen: v7x
topology: tpu7x:2x2x1
jax: 0.10.0
libtpu: 0.0.40
codegen_flags: <defaults>
</compile_context>

<pallas_src>
import jax
import jax.numpy as jnp
from jax.experimental import pallas as pl
from jax.experimental.pallas import tpu as pltpu

_LEAKY_SLOPE = 0.01  # PyTorch nn.LeakyReLU() default


def _traf_kernel(x_ref, w1_ref, b1_ref, w2_ref, b2_ref, o_ref):
    x = x_ref[...]                                                    # (TB, S*D)
    h = jnp.dot(x, w1_ref[...], preferred_element_type=jnp.float32)  # (TB, H*D)
    h = h + b1_ref[...]                                               # (1, H*D) broadcast
    h = jnp.where(h >= 0.0, h, _LEAKY_SLOPE * h)                      # LeakyReLU(0.01)
    h = jnp.dot(h, w2_ref[...], preferred_element_type=jnp.float32)  # (TB, n_out*D)
    h = h + b2_ref[...]
    # Exact sigmoid (keeps the zero-init `end` path bit-tight at 0.5); the divide
    # on n_out*D lanes is negligible next to the HBM traffic.
    o_ref[...] = (1.0 / (1.0 + jnp.exp(-h))).astype(o_ref.dtype)


def _cdiv(a, b):
    return -(-a // b)


def _round_up(x, m):
    return _cdiv(x, m) * m


def _num_tensorcores():
    # v7x has 2 TensorCores per chip; older generations have 1.  Fall back to 1.
    try:
        kind = jax.devices()[0].device_kind.lower()
    except Exception:
        return 1
    return 2 if "v7" in kind else 1


_NCORES = _num_tensorcores()


@jax.jit
def traf_forward(input_x, params):
    """input_x: (B, S, D) float32 -> (B, S*2//3, D), matching TraF.forward."""
    w1, b1, w2, b2 = params          # PyTorch layout: w1 (H, S), w2 (n_out, H)
    B, S, D = input_x.shape
    H = w1.shape[0]
    n_out = w2.shape[0]

    # ---- Block-diagonal weight expansion over D (tiny, done once per trace). ----
    eye_d = jnp.eye(D, dtype=w1.dtype)
    w1_exp = jnp.einsum("hs,de->sdhe", w1, eye_d).reshape(S * D, H * D)
    b1_exp = jnp.repeat(b1, D).reshape(1, H * D)
    w2_exp = jnp.einsum("oh,de->hdoe", w2, eye_d).reshape(H * D, n_out * D)
    b2_exp = jnp.repeat(b2, D).reshape(1, n_out * D)

    # Free re-interpretation: row b is [x[b,0,0..D-1], x[b,1,0..D-1], ...].
    x_flat = input_x.reshape(B, S * D)

    # ---- Tile selection over B (sublane axis). ----
    tb_pref = 4096                      # ~1.3 KiB/row -> 4K-row tiles are a few MiB
    b8 = _round_up(B, 8)
    n_tiles = max(1, _cdiv(b8, tb_pref))
    if _NCORES > 1 and b8 >= 16:
        n_tiles = _round_up(n_tiles, _NCORES)   # balanced work for v7x's two TCs
    tb = _round_up(_cdiv(b8, n_tiles), 8)
    b_pad = n_tiles * tb
    if b_pad != B:
        # Zero rows flow through the MLP to finite values; sliced off below.
        x_flat = jnp.pad(x_flat, ((0, b_pad - B), (0, 0)))

    resident = lambda shape: pl.BlockSpec(shape, lambda i: (0, 0))

    cost = pl.CostEstimate(
        flops=2 * b_pad * D * D * (S * H + H * n_out),
        transcendentals=b_pad * n_out * D,           # one exp per output element
        bytes_accessed=4 * (b_pad * S * D + b_pad * n_out * D
                            + S * D * H * D + H * D * n_out * D + H * D + n_out * D),
    )

    out_flat = pl.pallas_call(
        _traf_kernel,
        out_shape=jax.ShapeDtypeStruct((b_pad, n_out * D), jnp.float32),
        grid=(n_tiles,),
        in_specs=[
            pl.BlockSpec((tb, S * D), lambda i: (i, 0)),   # activation tile (full rows)
            resident((S * D, H * D)), resident((1, H * D)),        # layer-1 (resident)
            resident((H * D, n_out * D)), resident((1, n_out * D)),  # layer-2 (resident)
        ],
        out_specs=pl.BlockSpec((tb, n_out * D), lambda i: (i, 0)),
        compiler_params=pltpu.CompilerParams(
            dimension_semantics=("parallel",),     # independent tiles -> megacore on v7x
            vmem_limit_bytes=32 * 1024 * 1024,
        ),
        cost_estimate=cost,
    )(x_flat, w1_exp, b1_exp, w2_exp, b2_exp)

    # (b_pad, n_out*D) -> (B, n_out, D): slice + free reshape, matches PyTorch layout.
    return out_flat[:B].reshape(B, n_out, D)


def init_params(key, input_dim, output_dim, zero_end=True):
    """Weights in PyTorch nn.Linear layout: (out_features, in_features)."""
    n_out = input_dim * 2 // 3
    k1, k2, k3, k4 = jax.random.split(key, 4)
    w1 = 0.1 * jax.random.normal(k1, (output_dim, input_dim), dtype=jnp.float32)
    b1 = 0.1 * jax.random.normal(k2, (output_dim,), dtype=jnp.float32)
    if zero_end:
        # Matches TraF.__init__: the `end` Linear is zero-initialised.
        w2 = jnp.zeros((n_out, output_dim), dtype=jnp.float32)
        b2 = jnp.zeros((n_out,), dtype=jnp.float32)
    else:
        w2 = 0.1 * jax.random.normal(k3, (n_out, output_dim), dtype=jnp.float32)
        b2 = 0.1 * jax.random.normal(k4, (n_out,), dtype=jnp.float32)
    return (w1, b1, w2, b2)


def _reference_forward(input_x, params):
    w1, b1, w2, b2 = params
    h = jnp.transpose(input_x, (0, 2, 1))                 # (B, D, S)
    h = h @ w1.T + b1
    h = jnp.where(h >= 0.0, h, _LEAKY_SLOPE * h)
    h = jax.nn.sigmoid(h @ w2.T + b2)
    return jnp.transpose(h, (0, 2, 1))                    # (B, n_out, D)


if __name__ == "__main__":
    input_dim = 12        # segment_len
    output_dim = 64
    dim = 4
    batch = 160           # small; splits into two balanced 80-row tiles on v7x

    key = jax.random.PRNGKey(0)
    kx, kp = jax.random.split(key)
    input_x = jax.random.normal(kx, (batch, input_dim, dim), dtype=jnp.float32)

    # TraF.__init__ zero-inits the `end` Linear (forward output would be all 0.5);
    # use non-zero weights here so the numerical check exercises the full datapath.
    params = init_params(kp, input_dim, output_dim, zero_end=False)

    out = traf_forward(input_x, params)
    jax.block_until_ready(out)

    n_out = input_dim * 2 // 3
    ref = _reference_forward(input_x, params)
    assert out.shape == (batch, n_out, dim), out.shape
    assert jnp.allclose(out, ref, atol=1e-5, rtol=1e-5), float(jnp.max(jnp.abs(out - ref)))

    # Also check the module's actual zero-initialised `end`: output must be 0.5 everywhere.
    params0 = init_params(kp, input_dim, output_dim, zero_end=True)
    out0 = traf_forward(input_x, params0)
    jax.block_until_ready(out0)
    assert jnp.allclose(out0, jnp.full_like(out0, 0.5), atol=1e-6)

    print("KERNEL_OK")
</pallas_src>

<mosaic_0001>
module attributes {stable_mosaic.version = 11 : i64} {
  func.func @_traf_kernel(%arg0: i32, %arg1: memref<160x48xf32, #tpu.memory_space<vmem>>, %arg2: memref<48x256xf32, #tpu.memory_space<vmem>>, %arg3: memref<1x256xf32, #tpu.memory_space<vmem>>, %arg4: memref<256x32xf32, #tpu.memory_space<vmem>>, %arg5: memref<1x32xf32, #tpu.memory_space<vmem>>, %arg6: memref<160x32xf32, #tpu.memory_space<vmem>>) attributes {dimension_semantics = [#tpu.dimension_semantics<parallel>], iteration_bounds = array<i64: 1>, scalar_prefetch = 0 : i64, scratch_operands = 0 : i64, tpu.core_type = #tpu.core_type<tc>, window_params = [{transform_indices = @transform_0, window_bounds = array<i64: 160, 48>}, {pipeline_mode = #tpu.pipeline_mode<synchronous>, transform_indices = @transform_1, window_bounds = array<i64: 48, 256>}, {pipeline_mode = #tpu.pipeline_mode<synchronous>, transform_indices = @transform_2, window_bounds = array<i64: 1, 256>}, {pipeline_mode = #tpu.pipeline_mode<synchronous>, transform_indices = @transform_3, window_bounds = array<i64: 256, 32>}, {pipeline_mode = #tpu.pipeline_mode<synchronous>, transform_indices = @transform_4, window_bounds = array<i64: 1, 32>}, {transform_indices = @transform_5, window_bounds = array<i64: 160, 32>}]} {
    %c0 = arith.constant 0 : index
    %c0_0 = arith.constant 0 : index
    %0 = vector.load %arg1[%c0, %c0_0] : memref<160x48xf32, #tpu.memory_space<vmem>>, vector<160x48xf32>
    %c0_1 = arith.constant 0 : index
    %c0_2 = arith.constant 0 : index
    %1 = vector.load %arg2[%c0_1, %c0_2] : memref<48x256xf32, #tpu.memory_space<vmem>>, vector<48x256xf32>
    %cst = arith.constant dense<0.000000e+00> : vector<160x256xf32>
    %2 = tpu.matmul %0, %1, %cst {dimension_numbers = #tpu.dot_dimension_numbers<[1], [0], [0], [1], [0, 0, 1, 1], [], []>} : vector<160x48xf32>, vector<48x256xf32>, vector<160x256xf32> -> vector<160x256xf32>
    %c0_3 = arith.constant 0 : index
    %c0_4 = arith.constant 0 : index
    %3 = vector.load %arg3[%c0_3, %c0_4] : memref<1x256xf32, #tpu.memory_space<vmem>>, vector<1x256xf32>
    %4 = vector.broadcast %3 : vector<1x256xf32> to vector<160x256xf32>
    %5 = arith.addf %2, %4 : vector<160x256xf32>
    %cst_5 = arith.constant 0.000000e+00 : f32
    %6 = vector.broadcast %cst_5 : f32 to vector<160x256xf32>
    %7 = arith.cmpf oge, %5, %6 : vector<160x256xf32>
    %cst_6 = arith.constant 0.00999999977 : f32
    %8 = vector.broadcast %cst_6 : f32 to vector<160x256xf32>
    %9 = arith.mulf %8, %5 : vector<160x256xf32>
    %10 = arith.select %7, %5, %9 : vector<160x256xi1>, vector<160x256xf32>
    %c0_7 = arith.constant 0 : index
    %c0_8 = arith.constant 0 : index
    %11 = vector.load %arg4[%c0_7, %c0_8] : memref<256x32xf32, #tpu.memory_space<vmem>>, vector<256x32xf32>
    %cst_9 = arith.constant dense<0.000000e+00> : vector<160x32xf32>
    %12 = tpu.matmul %10, %11, %cst_9 {dimension_numbers = #tpu.dot_dimension_numbers<[1], [0], [0], [1], [0, 0, 1, 1], [], []>} : vector<160x256xf32>, vector<256x32xf32>, vector<160x32xf32> -> vector<160x32xf32>
    %c0_10 = arith.constant 0 : index
    %c0_11 = arith.constant 0 : index
    %13 = vector.load %arg5[%c0_10, %c0_11] : memref<1x32xf32, #tpu.memory_space<vmem>>, vector<1x32xf32>
    %14 = vector.broadcast %13 : vector<1x32xf32> to vector<160x32xf32>
    %15 = arith.addf %12, %14 : vector<160x32xf32>
    %cst_12 = arith.constant 0.000000e+00 : f32
    %16 = vector.broadcast %cst_12 : f32 to vector<160x32xf32>
    %17 = arith.subf %16, %15 : vector<160x32xf32>
    %18 = math.exp %17 : vector<160x32xf32>
    %cst_13 = arith.constant 1.000000e+00 : f32
    %19 = vector.broadcast %cst_13 : f32 to vector<160x32xf32>
    %20 = arith.addf %19, %18 : vector<160x32xf32>
    %cst_14 = arith.constant 1.000000e+00 : f32
    %21 = vector.broadcast %cst_14 : f32 to vector<160x32xf32>
    %22 = arith.divf %21, %20 : vector<160x32xf32>
    %c0_15 = arith.constant 0 : index
    %c0_16 = arith.constant 0 : index
    %23 = vector.load %arg6[%c0_15, %c0_16] : memref<160x32xf32, #tpu.memory_space<vmem>>, vector<160x32xf32>
    tpu.vector_store %arg6[%c0_15, %c0_16], %22 {strides = array<i32>} : memref<160x32xf32, #tpu.memory_space<vmem>>, vector<160x32xf32>,
    return
  }
  func.func @transform_0(%arg0: i32) -> (i32, i32) {
    %c0_i32 = arith.constant 0 : i32
    %c0_i32_0 = arith.constant 0 : i32
    return %arg0, %c0_i32 : i32, i32
  }
  func.func @transform_1(%arg0: i32) -> (i32, i32) {
    %c0_i32 = arith.constant 0 : i32
    %c0_i32_0 = arith.constant 0 : i32
    %c0_i32_1 = arith.constant 0 : i32
    return %c0_i32, %c0_i32_0 : i32, i32
  }
  func.func @transform_2(%arg0: i32) -> (i32, i32) {
    %c0_i32 = arith.constant 0 : i32
    %c0_i32_0 = arith.constant 0 : i32
    %c0_i32_1 = arith.constant 0 : i32
    return %c0_i32, %c0_i32_0 : i32, i32
  }
  func.func @transform_3(%arg0: i32) -> (i32, i32) {
    %c0_i32 = arith.constant 0 : i32
    %c0_i32_0 = arith.constant 0 : i32
    %c0_i32_1 = arith.constant 0 : i32
    return %c0_i32, %c0_i32_0 : i32, i32
  }
  func.func @transform_4(%arg0: i32) -> (i32, i32) {
    %c0_i32 = arith.constant 0 : i32
    %c0_i32_0 = arith.constant 0 : i32
    %c0_i32_1 = arith.constant 0 : i32
    return %c0_i32, %c0_i32_0 : i32, i32
  }
  func.func @transform_5(%arg0: i32) -> (i32, i32) {
    %c0_i32 = arith.constant 0 : i32
    %c0_i32_0 = arith.constant 0 : i32
    return %arg0, %c0_i32 : i32, i32
  }
}

</mosaic_0001>

<llo_original>
// kernel: traf_forward.1
$region0: #{traf_forward.1}
  #allocation0 [shape = 'u32[]', space=smem, size = 0x4, offset = 0x4, fixed_abs, tag = 'smem constant byte address 0x4 - core index']
  #allocation1 [shape = 'u32[144,128]{1,0:T(1,128)}', space=vmem, size = 0x12000, scoped, tag = 'internal scratch']
  %s0 = inlined_call_operand.vmem [shape: f32[160,48], index: 0, kind: input, shape index: {}]
  %s1 = inlined_call_operand.vmem [shape: f32[48,256], index: 1, kind: input, shape index: {}]
  %s2 = inlined_call_operand.vmem [shape: f32[1,256], index: 2, kind: input, shape index: {}]
  %s3 = inlined_call_operand.vmem [shape: f32[256,32], index: 3, kind: input, shape index: {}]
  %s4 = inlined_call_operand.vmem [shape: f32[1,32], index: 4, kind: input, shape index: {}]
  %s5 = inlined_call_operand.vmem [shape: f32[160,32], index: 5, kind: output, shape index: {}]
  %s6 = sld [smem:[#allocation0]]
  $region30: #{traf_forward.1} parent=0
    _
  %s8 = ssub.s32 1, %s6
  %s9 = scalar_select 0, %s8, %s6
  // Predicated region
  $region2: #{traf_forward.1} parent=0 // pred_check
    _
  $region3: #{traf_forward.1} parent=0 // pred_check_branch
    %11 = sbr.rel (0) target = $region5
  $region4: #{traf_forward.1} parent=0 // pred_region
    _
  $region5: #{traf_forward.1} parent=0 // pred_fallthru
    _
  // Predicated region
  $region6: #{traf_forward.1} parent=0 // pred_check
    _
  $region7: #{traf_forward.1} parent=0 // pred_check_branch
    %13 = sbr.rel (0) target = $region9
  $region8: #{traf_forward.1} parent=0 // pred_region
    _
  $region9: #{traf_forward.1} parent=0 // pred_fallthru
    _
  // Predicated region
  $region10: #{traf_forward.1} parent=0 // pred_check
    _
  $region11: #{traf_forward.1} parent=0 // pred_check_branch
    %15 = sbr.rel (0) target = $region13
  $region12: #{traf_forward.1} parent=0 // pred_region
    _
  $region13: #{traf_forward.1} parent=0 // pred_fallthru
    _
  // Predicated region
  $region14: #{traf_forward.1} parent=0 // pred_check
    _
  $region15: #{traf_forward.1} parent=0 // pred_check_branch
    %17 = sbr.rel (0) target = $region17
  $region16: #{traf_forward.1} parent=0 // pred_region
    _
  $region17: #{traf_forward.1} parent=0 // pred_fallthru
    _
  // Predicated region
  $region18: #{traf_forward.1} parent=0 // pred_check
    _
  $region19: #{traf_forward.1} parent=0 // pred_check_branch
    %19 = sbr.rel (0) target = $region21
  $region20: #{traf_forward.1} parent=0 // pred_region
    _
  $region21: #{traf_forward.1} parent=0 // pred_fallthru
    _
  %v20 = vld [vmem:[%s0] sm:$0xff]
  %v21 = vld [vmem:[%s0 + $0x8] sm:$0xff]
  %v22 = vld [vmem:[%s0 + $0x10] sm:$0xff]
  %v23 = vld [vmem:[%s0 + $0x18] sm:$0xff]
  %v24 = vld [vmem:[%s0 + $0x20] sm:$0xff]
  %v25 = vld [vmem:[%s0 + $0x28] sm:$0xff]
  %v26 = vld [vmem:[%s0 + $0x30] sm:$0xff]
  %v27 = vld [vmem:[%s0 + $0x38] sm:$0xff]
  %v28 = vld [vmem:[%s0 + $0x40] sm:$0xff]
  %v29 = vld [vmem:[%s0 + $0x48] sm:$0xff]
  %v30 = vld [vmem:[%s0 + $0x50] sm:$0xff]
  %v31 = vld [vmem:[%s0 + $0x58] sm:$0xff]
  %v32 = vld [vmem:[%s0 + $0x60] sm:$0xff]
  %v33 = vld [vmem:[%s0 + $0x68] sm:$0xff]
  %v34 = vld [vmem:[%s0 + $0x70] sm:$0xff]
  %v35 = vld [vmem:[%s0 + $0x78] sm:$0xff]
  %v36 = vld [vmem:[%s0 + $0x80] sm:$0xff]
  %v37 = vld [vmem:[%s0 + $0x88] sm:$0xff]
  %v38 = vld [vmem:[%s0 + $0x90] sm:$0xff]
  %v39 = vld [vmem:[%s0 + $0x98] sm:$0xff]
  %v40 = vld [vmem:[%s1] sm:$0xff]
  %v41 = vld [vmem:[%s1 + $0x8] sm:$0xff]
  %v42 = vld [vmem:[%s1 + $0x10] sm:$0xff]
  %v43 = vld [vmem:[%s1 + $0x18] sm:$0xff]
  %v44 = vld [vmem:[%s1 + $0x20] sm:$0xff]
  %v45 = vld [vmem:[%s1 + $0x28] sm:$0xff]
  %v46 = vld [vmem:[%s1 + $0x30] sm:$0xff]
  %v47 = vld [vmem:[%s1 + $0x38] sm:$0xff]
  %v48 = vld [vmem:[%s1 + $0x40] sm:$0xff]
  %v49 = vld [vmem:[%s1 + $0x48] sm:$0xff]
  %v50 = vld [vmem:[%s1 + $0x50] sm:$0xff]
  %v51 = vld [vmem:[%s1 + $0x58] sm:$0xff]
  %v52 = vld [vmem:[%s2] sm:$0x3]
  %v54 = vlaneseq
  %v55 = vshrl.u32 %v54, 7
  %v56 = vsub.s32 0, %v55
  %v57 = vrot.slane %v52, %v56
  %v58 = vlaneseq
  %v59 = vshrl.u32 %v58, 7
  %v60 = vsub.s32 1, %v59
  %v61 = vrot.slane %v52, %v60
  %vm64 = vcmask 392192
  %v66 = vsel %vm64, %v20, 0
  %v69 = vsel %vm64, %v21, 0
  %v72 = vsel %vm64, %v22, 0
  %v75 = vsel %vm64, %v23, 0
  %v78 = vsel %vm64, %v24, 0
  %v81 = vsel %vm64, %v25, 0
  %v84 = vsel %vm64, %v26, 0
  %v87 = vsel %vm64, %v27, 0
  %v90 = vsel %vm64, %v28, 0
  %v93 = vsel %vm64, %v29, 0
  %v96 = vsel %vm64, %v30, 0
  %v99 = vsel %vm64, %v31, 0
  %v102 = vsel %vm64, %v32, 0
  %v105 = vsel %vm64, %v33, 0
  %v108 = vsel %vm64, %v34, 0
  %v111 = vsel %vm64, %v35, 0
  %v114 = vsel %vm64, %v36, 0
  %v117 = vsel %vm64, %v37, 0
  %v120 = vsel %vm64, %v38, 0
  %v123 = vsel %vm64, %v39, 0
  %125 = vmatprep.subr.mxu0 %v41
  %126 = vmatpush1.msra.mxu0 %v40
  %127 = vmatprep.subr.mxu0 %v43
  %128 = vmatpush1.msra.mxu0 %v42
  %129 = vmatprep.subr.mxu0 %v45
  %130 = vmatpush1.msra.mxu0 %v44
  %131 = vmatprep.subr.mxu0 %v47
  %132 = vmatpush1.msra.mxu0 %v46
  %133 = vmatprep.subr.mxu0 %v49
  %134 = vmatpush1.msra.mxu0 %v48
  %135 = vmatprep.subr.mxu0 %v51
  %136 = vmatpush1.msra.mxu0 %v50
  %137 = vmatprep.subr.mxu0 0.0
  %138 = vmatpush1.msra.mxu0 0.0
  %139 = vmatprep.subr.mxu0 0.0
  %140 = vmatpush1.msra.mxu0 0.0
  %141 = vmatprep.subr.mxu0 0.0
  %142 = vmatpush1.msra.mxu0 0.0
  %143 = vmatprep.subr.mxu0 0.0
  %144 = vmatpush1.msra.mxu0 0.0
  %145 = vmatprep.subr.mxu0 0.0
  %146 = vmatpush1.msra.mxu0 0.0
  %147 = vmatprep.subr.mxu0 0.0
  %148 = vmatpush1.msra.mxu0 0.0
  %149 = vmatprep.subr.mxu0 0.0
  %150 = vmatpush1.msra.mxu0 0.0
  %151 = vmatprep.subr.mxu0 0.0
  %152 = vmatpush1.msra.mxu0 0.0
  %153 = vmatprep.subr.mxu0 0.0
  %154 = vmatpush1.msra.mxu0 0.0
  %155 = vmatprep.subr.mxu0 0.0
  %156 = vmatpush1.msra.mxu0 0.0
  %157 = vmatprep.subr.mxu0 0.0
  %158 = vmatpush1.msra.mxu0 0.0
  %159 = vmatprep.subr.mxu0 0.0
  %160 = vmatpush1.msra.mxu0 0.0
  %161 = vmatprep.subr.mxu0 0.0
  %162 = vmatpush1.msra.mxu0 0.0
  %163 = vmatprep.subr.mxu0 0.0
  %164 = vmatpush1.msra.mxu0 0.0
  %165 = vmatprep.subr.mxu0 0.0
  %166 = vmatpush1.msra.mxu0 0.0
  %167 = vmatprep.subr.mxu0 0.0
  %168 = vmatpush1.msra.mxu0 0.0
  %169 = vmatprep.subr.mxu0 0.0
  %170 = vmatpush1.msra.mxu0 0.0
  %171 = vmatprep.subr.mxu0 0.0
  %172 = vmatpush1.msra.mxu0 0.0
  %173 = vmatprep.subr.mxu0 0.0
  %174 = vmatpush1.msra.mxu0 0.0
  %175 = vmatprep.subr.mxu0 0.0
  %176 = vmatpush1.msra.mxu0 0.0
  %177 = vmatprep.subr.mxu0 0.0
  %178 = vmatpush1.msra.mxu0 0.0
  %179 = vmatprep.subr.mxu0 0.0
  %180 = vmatpush1.msra.mxu0 0.0
  %181 = vmatprep.subr.mxu0 0.0
  %182 = vmatpush1.msra.mxu0 0.0
  %183 = vmatprep.subr.mxu0 0.0
  %184 = vmatpush1.msra.mxu0 0.0
  %185 = vmatprep.subr.mxu0 0.0
  %186 = vmatpush1.msra.mxu0 0.0
  %187 = vmatprep.subr.mxu0 0.0
  %188 = vmatpush1.msra.mxu0 0.0
  %189 = vmatprep.mubr.f32.mxu0 0.0
  %190 = vmatmul.mubr.f32.gmra.mrb[0].mxu0 %v66
  %v191 = vpop.f32.mrb[0].mxu0
  %v192 = vadd.f32 %v57, %v191
  %v193 = vpop.f32.mrb[0].mxu0
  %v194 = vadd.f32 %v61, %v193
  %195 = vmatprep.mubr.f32.mxu0 0.0
  %196 = vmatmul.mubr.f32.gmra.mrb[0].mxu0 %v69
  %v197 = vpop.f32.mrb[0].mxu0
  %v198 = vadd.f32 %v57, %v197
  %v199 = vpop.f32.mrb[0].mxu0
  %v200 = vadd.f32 %v61, %v199
  %201 = vmatprep.mubr.f32.mxu0 0.0
  %202 = vmatmul.mubr.f32.gmra.mrb[0].mxu0 %v72
  %v203 = vpop.f32.mrb[0].mxu0
  %v204 = vadd.f32 %v57, %v203
  %v205 = vpop.f32.mrb[0].mxu0
  %v206 = vadd.f32 %v61, %v205
  %207 = vmatprep.mubr.f32.mxu0 0.0
  %208 = vmatmul.mubr.f32.gmra.mrb[0].mxu0 %v75
  %v209 = vpop.f32.mrb[0].mxu0
  %v210 = vadd.f32 %v57, %v209
  %v211 = vpop.f32.mrb[0].mxu0
  %v212 = vadd.f32 %v61, %v211
  %213 = vmatprep.mubr.f32.mxu0 0.0
  %214 = vmatmul.mubr.f32.gmra.mrb[0].mxu0 %v78
  %v215 = vpop.f32.mrb[0].mxu0
  %v216 = vadd.f32 %v57, %v215
  %v217 = vpop.f32.mrb[0].mxu0
  %v218 = vadd.f32 %v61, %v217
  %219 = vmatprep.mubr.f32.mxu0 0.0
  %220 = vmatmul.mubr.f32.gmra.mrb[0].mxu0 %v81
  %v221 = vpop.f32.mrb[0].mxu0
  %v222 = vadd.f32 %v57, %v221
  %v223 = vpop.f32.mrb[0].mxu0
  %v224 = vadd.f32 %v61, %v223
  %225 = vmatprep.mubr.f32.mxu0 0.0
  %226 = vmatmul.mubr.f32.gmra.mrb[0].mxu0 %v84
  %v227 = vpop.f32.mrb[0].mxu0
  %v228 = vadd.f32 %v57, %v227
  %v229 = vpop.f32.mrb[0].mxu0
  %v230 = vadd.f32 %v61, %v229
  %231 = vmatprep.mubr.f32.mxu0 0.0
  %232 = vmatmul.mubr.f32.gmra.mrb[0].mxu0 %v87
  %v233 = vpop.f32.mrb[0].mxu0
  %v234 = vadd.f32 %v57, %v233
  %v235 = vpop.f32.mrb[0].mxu0
  %v236 = vadd.f32 %v61, %v235
  %237 = vmatprep.mubr.f32.mxu0 0.0
  %238 = vmatmul.mubr.f32.gmra.mrb[0].mxu0 %v90
  %v239 = vpop.f32.mrb[0].mxu0
  %v240 = vadd.f32 %v57, %v239
  %v241 = vpop.f32.mrb[0].mxu0
  %v242 = vadd.f32 %v61, %v241
  %243 = vmatprep.mubr.f32.mxu0 0.0
  %244 = vmatmul.mubr.f32.gmra.mrb[0].mxu0 %v93
  %v245 = vpop.f32.mrb[0].mxu0
  %v246 = vadd.f32 %v57, %v245
  %v247 = vpop.f32.mrb[0].mxu0
  %v248 = vadd.f32 %v61, %v247
  %249 = vmatprep.mubr.f32.mxu0 0.0
  %250 = vmatmul.mubr.f32.gmra.mrb[0].mxu0 %v96
  %v251 = vpop.f32.mrb[0].mxu0
  %v252 = vadd.f32 %v57, %v251
  %v253 = vpop.f32.mrb[0].mxu0
  %v254 = vadd.f32 %v61, %v253
  %255 = vmatprep.mubr.f32.mxu0 0.0
  %256 = vmatmul.mubr.f32.gmra.mrb[0].mxu0 %v99
  %v257 = vpop.f32.mrb[0].mxu0
  %v258 = vadd.f32 %v57, %v257
  %v259 = vpop.f32.mrb[0].mxu0
  %v260 = vadd.f32 %v61, %v259
  %261 = vmatprep.mubr.f32.mxu0 0.0
  %262 = vmatmul.mubr.f32.gmra.mrb[0].mxu0 %v102
  %v263 = vpop.f32.mrb[0].mxu0
  %v264 = vadd.f32 %v57, %v263
  %v265 = vpop.f32.mrb[0].mxu0
  %v266 = vadd.f32 %v61, %v265
  %267 = vmatprep.mubr.f32.mxu0 0.0
  %268 = vmatmul.mubr.f32.gmra.mrb[0].mxu0 %v105
  %v269 = vpop.f32.mrb[0].mxu0
  %v270 = vadd.f32 %v57, %v269
  %v271 = vpop.f32.mrb[0].mxu0
  %v272 = vadd.f32 %v61, %v271
  %273 = vmatprep.mubr.f32.mxu0 0.0
  %274 = vmatmul.mubr.f32.gmra.mrb[0].mxu0 %v108
  %v275 = vpop.f32.mrb[0].mxu0
  %v276 = vadd.f32 %v57, %v275
  %v277 = vpop.f32.mrb[0].mxu0
  %v278 = vadd.f32 %v61, %v277
  %279 = vmatprep.mubr.f32.mxu0 0.0
  %280 = vmatmul.mubr.f32.gmra.mrb[0].mxu0 %v111
  %v281 = vpop.f32.mrb[0].mxu0
  %v282 = vadd.f32 %v57, %v281
  %v283 = vpop.f32.mrb[0].mxu0
  %v284 = vadd.f32 %v61, %v283
  %285 = vmatprep.mubr.f32.mxu0 0.0
  %286 = vmatmul.mubr.f32.gmra.mrb[0].mxu0 %v114
  %v287 = vpop.f32.mrb[0].mxu0
  %v288 = vadd.f32 %v57, %v287
  %v289 = vpop.f32.mrb[0].mxu0
  %v290 = vadd.f32 %v61, %v289
  %291 = vmatprep.mubr.f32.mxu0 0.0
  %292 = vmatmul.mubr.f32.gmra.mrb[0].mxu0 %v117
  %v293 = vpop.f32.mrb[0].mxu0
  %v294 = vadd.f32 %v57, %v293
  %v295 = vpop.f32.mrb[0].mxu0
  %v296 = vadd.f32 %v61, %v295
  %297 = vmatprep.mubr.f32.mxu0 0.0
  %298 = vmatmul.mubr.f32.gmra.mrb[0].mxu0 %v120
  %v299 = vpop.f32.mrb[0].mxu0
  %v300 = vadd.f32 %v57, %v299
  %v301 = vpop.f32.mrb[0].mxu0
  %v302 = vadd.f32 %v61, %v301
  %303 = vmatprep.mubr.f32.mxu0 0.0
  %304 = vmatmul.mubr.f32.gmra.mrb[0].mxu0 %v123
  %v305 = vpop.f32.mrb[0].mxu0
  %v306 = vadd.f32 %v57, %v305
  %v307 = vpop.f32.mrb[0].mxu0
  %v308 = vadd.f32 %v61, %v307
  %309 = vdwg.mxu0
  %vm310 = vcmp.ge.f32.partialorder %v192, 0.0
  %vm311 = vcmp.ge.f32.partialorder %v194, 0.0
  %vm312 = vcmp.ge.f32.partialorder %v198, 0.0
  %vm313 = vcmp.ge.f32.partialorder %v200, 0.0
  %vm314 = vcmp.ge.f32.partialorder %v204, 0.0
  %vm315 = vcmp.ge.f32.partialorder %v206, 0.0
  %vm316 = vcmp.ge.f32.partialorder %v210, 0.0
  %vm317 = vcmp.ge.f32.partialorder %v212, 0.0
  %vm318 = vcmp.ge.f32.partialorder %v216, 0.0
  %vm319 = vcmp.ge.f32.partialorder %v218, 0.0
  %vm320 = vcmp.ge.f32.partialorder %v222, 0.0
  %vm321 = vcmp.ge.f32.partialorder %v224, 0.0
  %vm322 = vcmp.ge.f32.partialorder %v228, 0.0
  %vm323 = vcmp.ge.f32.partialorder %v230, 0.0
  %vm324 = vcmp.ge.f32.partialorder %v234, 0.0
  %vm325 = vcmp.ge.f32.partialorder %v236, 0.0
  %vm326 = vcmp.ge.f32.partialorder %v240, 0.0
  %vm327 = vcmp.ge.f32.partialorder %v242, 0.0
  %vm328 = vcmp.ge.f32.partialorder %v246, 0.0
  %vm329 = vcmp.ge.f32.partialorder %v248, 0.0
  %vm330 = vcmp.ge.f32.partialorder %v252, 0.0
  %vm331 = vcmp.ge.f32.partialorder %v254, 0.0
  %vm332 = vcmp.ge.f32.partialorder %v258, 0.0
  %vm333 = vcmp.ge.f32.partialorder %v260, 0.0
  %vm334 = vcmp.ge.f32.partialorder %v264, 0.0
  %vm335 = vcmp.ge.f32.partialorder %v266, 0.0
  %vm336 = vcmp.ge.f32.partialorder %v270, 0.0
  %vm337 = vcmp.ge.f32.partialorder %v272, 0.0
  %vm338 = vcmp.ge.f32.partialorder %v276, 0.0
  %vm339 = vcmp.ge.f32.partialorder %v278, 0.0
  %vm340 = vcmp.ge.f32.partialorder %v282, 0.0
  %vm341 = vcmp.ge.f32.partialorder %v284, 0.0
  %vm342 = vcmp.ge.f32.partialorder %v288, 0.0
  %vm343 = vcmp.ge.f32.partialorder %v290, 0.0
  %vm344 = vcmp.ge.f32.partialorder %v294, 0.0
  %vm345 = vcmp.ge.f32.partialorder %v296, 0.0
  %vm346 = vcmp.ge.f32.partialorder %v300, 0.0
  %vm347 = vcmp.ge.f32.partialorder %v302, 0.0
  %vm348 = vcmp.ge.f32.partialorder %v306, 0.0
  %vm349 = vcmp.ge.f32.partialorder %v308, 0.0
  %v350 = vmul.f32 %v192, 0.01
  %v351 = vmul.f32 %v194, 0.01
  %v352 = vmul.f32 %v198, 0.01
  %v353 = vmul.f32 %v200, 0.01
  %v354 = vmul.f32 %v204, 0.01
  %v355 = vmul.f32 %v206, 0.01
  %v356 = vmul.f32 %v210, 0.01
  %v357 = vmul.f32 %v212, 0.01
  %v358 = vmul.f32 %v216, 0.01
  %v359 = vmul.f32 %v218, 0.01
  %v360 = vmul.f32 %v222, 0.01
  %v361 = vmul.f32 %v224, 0.01
  %v362 = vmul.f32 %v228, 0.01
  %v363 = vmul.f32 %v230, 0.01
  %v364 = vmul.f32 %v234, 0.01
  %v365 = vmul.f32 %v236, 0.01
  %v366 = vmul.f32 %v240, 0.01
  %v367 = vmul.f32 %v242, 0.01
  %v368 = vmul.f32 %v246, 0.01
  %v369 = vmul.f32 %v248, 0.01
  %v370 = vmul.f32 %v252, 0.01
  %v371 = vmul.f32 %v254, 0.01
  %v372 = vmul.f32 %v258, 0.01
  %v373 = vmul.f32 %v260, 0.01
  %v374 = vmul.f32 %v264, 0.01
  %v375 = vmul.f32 %v266, 0.01
  %v376 = vmul.f32 %v270, 0.01
  %v377 = vmul.f32 %v272, 0.01
  %v378 = vmul.f32 %v276, 0.01
  %v379 = vmul.f32 %v278, 0.01
  %v380 = vmul.f32 %v282, 0.01
  %v381 = vmul.f32 %v284, 0.01
  %v382 = vmul.f32 %v288, 0.01
  %v383 = vmul.f32 %v290, 0.01
  %v384 = vmul.f32 %v294, 0.01
  %v385 = vmul.f32 %v296, 0.01
  %v386 = vmul.f32 %v300, 0.01
  %v387 = vmul.f32 %v302, 0.01
  %v388 = vmul.f32 %v306, 0.01
  %v389 = vmul.f32 %v308, 0.01
  %v390 = vsel %vm310, %v192, %v350
  %v391 = vsel %vm311, %v194, %v351
  %v392 = vsel %vm312, %v198, %v352
  %v393 = vsel %vm313, %v200, %v353
  %v394 = vsel %vm314, %v204, %v354
  %v395 = vsel %vm315, %v206, %v355
  %v396 = vsel %vm316, %v210, %v356
  %v397 = vsel %vm317, %v212, %v357
  %v398 = vsel %vm318, %v216, %v358
  %v399 = vsel %vm319, %v218, %v359
  %v400 = vsel %vm320, %v222, %v360
  %v401 = vsel %vm321, %v224, %v361
  %v402 = vsel %vm322, %v228, %v362
  %v403 = vsel %vm323, %v230, %v363
  %v404 = vsel %vm324, %v234, %v364
  %v405 = vsel %vm325, %v236, %v365
  %v406 = vsel %vm326, %v240, %v366
  %v407 = vsel %vm327, %v242, %v367
  %v408 = vsel %vm328, %v246, %v368
  %v409 = vsel %vm329, %v248, %v369
  %v410 = vsel %vm330, %v252, %v370
  %v411 = vsel %vm331, %v254, %v371
  %v412 = vsel %vm332, %v258, %v372
  %v413 = vsel %vm333, %v260, %v373
  %v414 = vsel %vm334, %v264, %v374
  %v415 = vsel %vm335, %v266, %v375
  %v416 = vsel %vm336, %v270, %v376
  %v417 = vsel %vm337, %v272, %v377
  %v418 = vsel %vm338, %v276, %v378
  %v419 = vsel %vm339, %v278, %v379
  %v420 = vsel %vm340, %v282, %v380
  %v421 = vsel %vm341, %v284, %v381
  %v422 = vsel %vm342, %v288, %v382
  %v423 = vsel %vm343, %v290, %v383
  %v424 = vsel %vm344, %v294, %v384
  %v425 = vsel %vm345, %v296, %v385
  %v426 = vsel %vm346, %v300, %v386
  %v427 = vsel %vm347, %v302, %v387
  %v428 = vsel %vm348, %v306, %v388
  %v429 = vsel %vm349, %v308, %v389
  %v430 = vld [vmem:[%s3] sm:$0xff]
  %v431 = vld [vmem:[%s3 + $0x8] sm:$0xff]
  %v432 = vld [vmem:[%s3 + $0x10] sm:$0xff]
  %v433 = vld [vmem:[%s3 + $0x18] sm:$0xff]
  %v434 = vld [vmem:[%s3 + $0x20] sm:$0xff]
  %v435 = vld [vmem:[%s3 + $0x28] sm:$0xff]
  %v436 = vld [vmem:[%s3 + $0x30] sm:$0xff]
  %v437 = vld [vmem:[%s3 + $0x38] sm:$0xff]
  %v438 = vld [vmem:[%s3 + $0x40] sm:$0xff]
  %v439 = vld [vmem:[%s3 + $0x48] sm:$0xff]
  %v440 = vld [vmem:[%s3 + $0x50] sm:$0xff]
  %v441 = vld [vmem:[%s3 + $0x58] sm:$0xff]
  %v442 = vld [vmem:[%s3 + $0x60] sm:$0xff]
  %v443 = vld [vmem:[%s3 + $0x68] sm:$0xff]
  %v444 = vld [vmem:[%s3 + $0x70] sm:$0xff]
  %v445 = vld [vmem:[%s3 + $0x78] sm:$0xff]
  %v446 = vld [vmem:[%s3 + $0x80] sm:$0xff]
  %v447 = vld [vmem:[%s3 + $0x88] sm:$0xff]
  %v448 = vld [vmem:[%s3 + $0x90] sm:$0xff]
  %v449 = vld [vmem:[%s3 + $0x98] sm:$0xff]
  %v450 = vld [vmem:[%s3 + $0xa0] sm:$0xff]
  %v451 = vld [vmem:[%s3 + $0xa8] sm:$0xff]
  %v452 = vld [vmem:[%s3 + $0xb0] sm:$0xff]
  %v453 = vld [vmem:[%s3 + $0xb8] sm:$0xff]
  %v454 = vld [vmem:[%s3 + $0xc0] sm:$0xff]
  %v455 = vld [vmem:[%s3 + $0xc8] sm:$0xff]
  %v456 = vld [vmem:[%s3 + $0xd0] sm:$0xff]
  %v457 = vld [vmem:[%s3 + $0xd8] sm:$0xff]
  %v458 = vld [vmem:[%s3 + $0xe0] sm:$0xff]
  %v459 = vld [vmem:[%s3 + $0xe8] sm:$0xff]
  %v460 = vld [vmem:[%s3 + $0xf0] sm:$0xff]
  %v461 = vld [vmem:[%s3 + $0xf8] sm:$0xff]
  %v462 = vld [vmem:[%s4] sm:$0x1]
  %v464 = vlaneseq
  %v465 = vshrl.u32 %v464, 7
  %v466 = vsub.s32 0, %v465
  %v467 = vrot.slane %v462, %v466
  %469 = vmatprep.subr.mxu0 0.0
  %470 = vmatpush1.msra.mxu0 %v430
  %471 = vmatprep.subr.mxu0 0.0
  %472 = vmatpush1.msra.mxu0 %v431
  %473 = vmatprep.subr.mxu0 0.0
  %474 = vmatpush1.msra.mxu0 %v432
  %475 = vmatprep.subr.mxu0 0.0
  %476 = vmatpush1.msra.mxu0 %v433
  %477 = vmatprep.subr.mxu0 0.0
  %478 = vmatpush1.msra.mxu0 %v434
  %479 = vmatprep.subr.mxu0 0.0
  %480 = vmatpush1.msra.mxu0 %v435
  %481 = vmatprep.subr.mxu0 0.0
  %482 = vmatpush1.msra.mxu0 %v436
  %483 = vmatprep.subr.mxu0 0.0
  %484 = vmatpush1.msra.mxu0 %v437
  %485 = vmatprep.subr.mxu0 0.0
  %486 = vmatpush1.msra.mxu0 %v438
  %487 = vmatprep.subr.mxu0 0.0
  %488 = vmatpush1.msra.mxu0 %v439
  %489 = vmatprep.subr.mxu0 0.0
  %490 = vmatpush1.msra.mxu0 %v440
  %491 = vmatprep.subr.mxu0 0.0
  %492 = vmatpush1.msra.mxu0 %v441
  %493 = vmatprep.subr.mxu0 0.0
  %494 = vmatpush1.msra.mxu0 %v442
  %495 = vmatprep.subr.mxu0 0.0
  %496 = vmatpush1.msra.mxu0 %v443
  %497 = vmatprep.subr.mxu0 0.0
  %498 = vmatpush1.msra.mxu0 %v444
  %499 = vmatprep.subr.mxu0 0.0
  %500 = vmatpush1.msra.mxu0 %v445
  %501 = vmatprep.subr.mxu0 0.0
  %502 = vmatpush1.msra.mxu0 %v446
  %503 = vmatprep.subr.mxu0 0.0
  %504 = vmatpush1.msra.mxu0 %v447
  %505 = vmatprep.subr.mxu0 0.0
  %506 = vmatpush1.msra.mxu0 %v448
  %507 = vmatprep.subr.mxu0 0.0
  %508 = vmatpush1.msra.mxu0 %v449
  %509 = vmatprep.subr.mxu0 0.0
  %510 = vmatpush1.msra.mxu0 %v450
  %511 = vmatprep.subr.mxu0 0.0
  %512 = vmatpush1.msra.mxu0 %v451
  %513 = vmatprep.subr.mxu0 0.0
  %514 = vmatpush1.msra.mxu0 %v452
  %515 = vmatprep.subr.mxu0 0.0
  %516 = vmatpush1.msra.mxu0 %v453
  %517 = vmatprep.subr.mxu0 0.0
  %518 = vmatpush1.msra.mxu0 %v454
  %519 = vmatprep.subr.mxu0 0.0
  %520 = vmatpush1.msra.mxu0 %v455
  %521 = vmatprep.subr.mxu0 0.0
  %522 = vmatpush1.msra.mxu0 %v456
  %523 = vmatprep.subr.mxu0 0.0
  %524 = vmatpush1.msra.mxu0 %v457
  %525 = vmatprep.subr.mxu0 0.0
  %526 = vmatpush1.msra.mxu0 %v458
  %527 = vmatprep.subr.mxu0 0.0
  %528 = vmatpush1.msra.mxu0 %v459
  %529 = vmatprep.subr.mxu0 0.0
  %530 = vmatpush1.msra.mxu0 %v460
  %531 = vmatprep.subr.mxu0 0.0
  %532 = vmatpush1.msra.mxu0 %v461
  %533 = vmatprep.mubr.f32.mxu0 %v391
  %534 = vmatmul.mubr.f32.gmra.mrb[0].mxu0 %v390
  %v535 = vpop.f32.mrb[0].mxu0
  %v536 = vadd.f32 %v467, %v535
  %v537 = vpop.f32.mrb[0].mxu0
  %538 = vmatprep.mubr.f32.mxu0 %v393
  %539 = vmatmul.mubr.f32.gmra.mrb[0].mxu0 %v392
  %v540 = vpop.f32.mrb[0].mxu0
  %v541 = vadd.f32 %v467, %v540
  %v542 = vpop.f32.mrb[0].mxu0
  %543 = vmatprep.mubr.f32.mxu0 %v395
  %544 = vmatmul.mubr.f32.gmra.mrb[0].mxu0 %v394
  %v545 = vpop.f32.mrb[0].mxu0
  %v546 = vadd.f32 %v467, %v545
  %v547 = vpop.f32.mrb[0].mxu0
  %548 = vmatprep.mubr.f32.mxu0 %v397
  %549 = vmatmul.mubr.f32.gmra.mrb[0].mxu0 %v396
  %v550 = vpop.f32.mrb[0].mxu0
  %v551 = vadd.f32 %v467, %v550
  %v552 = vpop.f32.mrb[0].mxu0
  %553 = vmatprep.mubr.f32.mxu0 %v399
  %554 = vmatmul.mubr.f32.gmra.mrb[0].mxu0 %v398
  %v555 = vpop.f32.mrb[0].mxu0
  %v556 = vadd.f32 %v467, %v555
  %v557 = vpop.f32.mrb[0].mxu0
  %558 = vmatprep.mubr.f32.mxu0 %v401
  %559 = vmatmul.mubr.f32.gmra.mrb[0].mxu0 %v400
  %v560 = vpop.f32.mrb[0].mxu0
  %v561 = vadd.f32 %v467, %v560
  %v562 = vpop.f32.mrb[0].mxu0
  %563 = vmatprep.mubr.f32.mxu0 %v403
  %564 = vmatmul.mubr.f32.gmra.mrb[0].mxu0 %v402
  %v565 = vpop.f32.mrb[0].mxu0
  %v566 = vadd.f32 %v467, %v565
  %v567 = vpop.f32.mrb[0].mxu0
  %568 = vmatprep.mubr.f32.mxu0 %v405
  %569 = vmatmul.mubr.f32.gmra.mrb[0].mxu0 %v404
  %v570 = vpop.f32.mrb[0].mxu0
  %v571 = vadd.f32 %v467, %v570
  %v572 = vpop.f32.mrb[0].mxu0
  %573 = vmatprep.mubr.f32.mxu0 %v407
  %574 = vmatmul.mubr.f32.gmra.mrb[0].mxu0 %v406
  %v575 = vpop.f32.mrb[0].mxu0
  %v576 = vadd.f32 %v467, %v575
  %v577 = vpop.f32.mrb[0].mxu0
  %578 = vmatprep.mubr.f32.mxu0 %v409
  %579 = vmatmul.mubr.f32.gmra.mrb[0].mxu0 %v408
  %v580 = vpop.f32.mrb[0].mxu0
  %v581 = vadd.f32 %v467, %v580
  %v582 = vpop.f32.mrb[0].mxu0
  %583 = vmatprep.mubr.f32.mxu0 %v411
  %584 = vmatmul.mubr.f32.gmra.mrb[0].mxu0 %v410
  %v585 = vpop.f32.mrb[0].mxu0
  %v586 = vadd.f32 %v467, %v585
  %v587 = vpop.f32.mrb[0].mxu0
  %588 = vmatprep.mubr.f32.mxu0 %v413
  %589 = vmatmul.mubr.f32.gmra.mrb[0].mxu0 %v412
  %v590 = vpop.f32.mrb[0].mxu0
  %v591 = vadd.f32 %v467, %v590
  %v592 = vpop.f32.mrb[0].mxu0
  %593 = vmatprep.mubr.f32.mxu0 %v415
  %594 = vmatmul.mubr.f32.gmra.mrb[0].mxu0 %v414
  %v595 = vpop.f32.mrb[0].mxu0
  %v596 = vadd.f32 %v467, %v595
  %v597 = vpop.f32.mrb[0].mxu0
  %598 = vmatprep.mubr.f32.mxu0 %v417
  %599 = vmatmul.mubr.f32.gmra.mrb[0].mxu0 %v416
  %v600 = vpop.f32.mrb[0].mxu0
  %v601 = vadd.f32 %v467, %v600
  %v602 = vpop.f32.mrb[0].mxu0
  %603 = vmatprep.mubr.f32.mxu0 %v419
  %604 = vmatmul.mubr.f32.gmra.mrb[0].mxu0 %v418
  %v605 = vpop.f32.mrb[0].mxu0
  %v606 = vadd.f32 %v467, %v605
  %v607 = vpop.f32.mrb[0].mxu0
  %608 = vmatprep.mubr.f32.mxu0 %v421
  %609 = vmatmul.mubr.f32.gmra.mrb[0].mxu0 %v420
  %v610 = vpop.f32.mrb[0].mxu0
  %v611 = vadd.f32 %v467, %v610
  %v612 = vpop.f32.mrb[0].mxu0
  %613 = vmatprep.mubr.f32.mxu0 %v423
  %614 = vmatmul.mubr.f32.gmra.mrb[0].mxu0 %v422
  %v615 = vpop.f32.mrb[0].mxu0
  %v616 = vadd.f32 %v467, %v615
  %v617 = vpop.f32.mrb[0].mxu0
  %618 = vmatprep.mubr.f32.mxu0 %v425
  %619 = vmatmul.mubr.f32.gmra.mrb[0].mxu0 %v424
  %v620 = vpop.f32.mrb[0].mxu0
  %v621 = vadd.f32 %v467, %v620
  %v622 = vpop.f32.mrb[0].mxu0
  %623 = vmatprep.mubr.f32.mxu0 %v427
  %624 = vmatmul.mubr.f32.gmra.mrb[0].mxu0 %v426
  %v625 = vpop.f32.mrb[0].mxu0
  %v626 = vadd.f32 %v467, %v625
  %v627 = vpop.f32.mrb[0].mxu0
  %628 = vmatprep.mubr.f32.mxu0 %v429
  %629 = vmatmul.mubr.f32.gmra.mrb[0].mxu0 %v428
  %v630 = vpop.f32.mrb[0].mxu0
  %v631 = vadd.f32 %v467, %v630
  %v632 = vpop.f32.mrb[0].mxu0
  %633 = vdwg.mxu0
  %v634 = vsub.f32 0.0, %v536
  %v635 = vsub.f32 0.0, %v541
  %v636 = vsub.f32 0.0, %v546
  %v637 = vsub.f32 0.0, %v551
  %v638 = vsub.f32 0.0, %v556
  %v639 = vsub.f32 0.0, %v561
  %v640 = vsub.f32 0.0, %v566
  %v641 = vsub.f32 0.0, %v571
  %v642 = vsub.f32 0.0, %v576
  %v643 = vsub.f32 0.0, %v581
  %v644 = vsub.f32 0.0, %v586
  %v645 = vsub.f32 0.0, %v591
  %v646 = vsub.f32 0.0, %v596
  %v647 = vsub.f32 0.0, %v601
  %v648 = vsub.f32 0.0, %v606
  %v649 = vsub.f32 0.0, %v611
  %v650 = vsub.f32 0.0, %v616
  %v651 = vsub.f32 0.0, %v621
  %v652 = vsub.f32 0.0, %v626
  %v653 = vsub.f32 0.0, %v631
  %v654 = vmul.f32 %v634, 1.442695
  %v655 = vpow.pop %v654
  %v656 = vmul.f32 %v635, 1.442695
  %v657 = vpow.pop %v656
  %v658 = vmul.f32 %v636, 1.442695
  %v659 = vpow.pop %v658
  %v660 = vmul.f32 %v637, 1.442695
  %v661 = vpow.pop %v660
  %v662 = vmul.f32 %v638, 1.442695
  %v663 = vpow.pop %v662
  %v664 = vmul.f32 %v639, 1.442695
  %v665 = vpow.pop %v664
  %v666 = vmul.f32 %v640, 1.442695
  %v667 = vpow.pop %v666
  %v668 = vmul.f32 %v641, 1.442695
  %v669 = vpow.pop %v668
  %v670 = vmul.f32 %v642, 1.442695
  %v671 = vpow.pop %v670
  %v672 = vmul.f32 %v643, 1.442695
  %v673 = vpow.pop %v672
  %v674 = vmul.f32 %v644, 1.442695
  %v675 = vpow.pop %v674
  %v676 = vmul.f32 %v645, 1.442695
  %v677 = vpow.pop %v676
  %v678 = vmul.f32 %v646, 1.442695
  %v679 = vpow.pop %v678
  %v680 = vmul.f32 %v647, 1.442695
  %v681 = vpow.pop %v680
  %v682 = vmul.f32 %v648, 1.442695
  %v683 = vpow.pop %v682
  %v684 = vmul.f32 %v649, 1.442695
  %v685 = vpow.pop %v684
  %v686 = vmul.f32 %v650, 1.442695
  %v687 = vpow.pop %v686
  %v688 = vmul.f32 %v651, 1.442695
  %v689 = vpow.pop %v688
  %v690 = vmul.f32 %v652, 1.442695
  %v691 = vpow.pop %v690
  %v692 = vmul.f32 %v653, 1.442695
  %v693 = vpow.pop %v692
  %v694 = vadd.f32 %v655, 1.0
  %v695 = vadd.f32 %v657, 1.0
  %v696 = vadd.f32 %v659, 1.0
  %v697 = vadd.f32 %v661, 1.0
  %v698 = vadd.f32 %v663, 1.0
  %v699 = vadd.f32 %v665, 1.0
  %v700 = vadd.f32 %v667, 1.0
  %v701 = vadd.f32 %v669, 1.0
  %v702 = vadd.f32 %v671, 1.0
  %v703 = vadd.f32 %v673, 1.0
  %v704 = vadd.f32 %v675, 1.0
  %v705 = vadd.f32 %v677, 1.0
  %v706 = vadd.f32 %v679, 1.0
  %v707 = vadd.f32 %v681, 1.0
  %v708 = vadd.f32 %v683, 1.0
  %v709 = vadd.f32 %v685, 1.0
  %v710 = vadd.f32 %v687, 1.0
  %v711 = vadd.f32 %v689, 1.0
  %v712 = vadd.f32 %v691, 1.0
  %v713 = vadd.f32 %v693, 1.0
  %v714 = vrcp.pop %v694
  %v715 = vmul.f32 1.0, %v714
  %v716 = vrcp.pop %v695
  %v717 = vmul.f32 1.0, %v716
  %v718 = vrcp.pop %v696
  %v719 = vmul.f32 1.0, %v718
  %v720 = vrcp.pop %v697
  %v721 = vmul.f32 1.0, %v720
  %v722 = vrcp.pop %v698
  %v723 = vmul.f32 1.0, %v722
  %v724 = vrcp.pop %v699
  %v725 = vmul.f32 1.0, %v724
  %v726 = vrcp.pop %v700
  %v727 = vmul.f32 1.0, %v726
  %v728 = vrcp.pop %v701
  %v729 = vmul.f32 1.0, %v728
  %v730 = vrcp.pop %v702
  %v731 = vmul.f32 1.0, %v730
  %v732 = vrcp.pop %v703
  %v733 = vmul.f32 1.0, %v732
  %v734 = vrcp.pop %v704
  %v735 = vmul.f32 1.0, %v734
  %v736 = vrcp.pop %v705
  %v737 = vmul.f32 1.0, %v736
  %v738 = vrcp.pop %v706
  %v739 = vmul.f32 1.0, %v738
  %v740 = vrcp.pop %v707
  %v741 = vmul.f32 1.0, %v740
  %v742 = vrcp.pop %v708
  %v743 = vmul.f32 1.0, %v742
  %v744 = vrcp.pop %v709
  %v745 = vmul.f32 1.0, %v744
  %v746 = vrcp.pop %v710
  %v747 = vmul.f32 1.0, %v746
  %v748 = vrcp.pop %v711
  %v749 = vmul.f32 1.0, %v748
  %v750 = vrcp.pop %v712
  %v751 = vmul.f32 1.0, %v750
  %v752 = vrcp.pop %v713
  %v753 = vmul.f32 1.0, %v752
  %vm754 = vcmask 261120
  %755 = vst.msk [vmem:[%s5] sm:$0xff] %vm754, %v715
  %756 = vst.msk [vmem:[%s5 + $0x8] sm:$0xff] %vm754, %v717
  %757 = vst.msk [vmem:[%s5 + $0x10] sm:$0xff] %vm754, %v719
  %758 = vst.msk [vmem:[%s5 + $0x18] sm:$0xff] %vm754, %v721
  %759 = vst.msk [vmem:[%s5 + $0x20] sm:$0xff] %vm754, %v723
  %760 = vst.msk [vmem:[%s5 + $0x28] sm:$0xff] %vm754, %v725
  %761 = vst.msk [vmem:[%s5 + $0x30] sm:$0xff] %vm754, %v727
  %762 = vst.msk [vmem:[%s5 + $0x38] sm:$0xff] %vm754, %v729
  %763 = vst.msk [vmem:[%s5 + $0x40] sm:$0xff] %vm754, %v731
  %764 = vst.msk [vmem:[%s5 + $0x48] sm:$0xff] %vm754, %v733
  %765 = vst.msk [vmem:[%s5 + $0x50] sm:$0xff] %vm754, %v735
  %766 = vst.msk [vmem:[%s5 + $0x58] sm:$0xff] %vm754, %v737
  %767 = vst.msk [vmem:[%s5 + $0x60] sm:$0xff] %vm754, %v739
  %768 = vst.msk [vmem:[%s5 + $0x68] sm:$0xff] %vm754, %v741
  %769 = vst.msk [vmem:[%s5 + $0x70] sm:$0xff] %vm754, %v743
  %770 = vst.msk [vmem:[%s5 + $0x78] sm:$0xff] %vm754, %v745
  %771 = vst.msk [vmem:[%s5 + $0x80] sm:$0xff] %vm754, %v747
  %772 = vst.msk [vmem:[%s5 + $0x88] sm:$0xff] %vm754, %v749
  %773 = vst.msk [vmem:[%s5 + $0x90] sm:$0xff] %vm754, %v751
  %774 = vst.msk [vmem:[%s5 + $0x98] sm:$0xff] %vm754, %v753
  // Predicated region
  $region22: #{traf_forward.1} parent=0 // pred_check
    _
  $region23: #{traf_forward.1} parent=0 // pred_check_branch
    %776 = sbr.rel (0) target = $region25
  $region24: #{traf_forward.1} parent=0 // pred_region
    _
  $region25: #{traf_forward.1} parent=0 // pred_fallthru
    _
  // Predicated region
  $region26: #{traf_forward.1} parent=0 // pred_check
    _
  $region27: #{traf_forward.1} parent=0 // pred_check_branch
    %778 = sbr.rel (0) target = $region29
  $region28: #{traf_forward.1} parent=0 // pred_region
    _
  $region29: #{traf_forward.1} parent=0 // pred_fallthru
    _

</llo_original>
